<compile_context>
chip_gen: v5e
topology: v5e:2x2
jax: 0.10.0
libtpu: 0.0.40
codegen_flags: <defaults>
</compile_context>

<pallas_src>
import jax
import jax.numpy as jnp
from jax.experimental import pallas as pl
from jax.experimental.pallas import tpu as pltpu


_TARGET_BLOCK_BYTES = 4 << 20   # ~4 MiB per input block; x2 double-buffered = 8 MiB
_VMEM_LIMIT_BYTES = 32 << 20    # headroom for v5e (16 MiB default scoped VMEM)


def _round_up(x, m):
    return ((x + m - 1) // m) * m


def _single_k_kernel(S, tile_s, out_dtype):
    """Whole spatial extent in one tile (grid_k == 1): no scratch, no pl.when."""
    needs_mask = (S % tile_s) != 0          # static: only emit masking if needed
    inv_s = 1.0 / float(S)

    def kernel(x_ref, omax_ref, omean_ref):
        chunk = x_ref[...]                  # (tile_r, tile_s), input dtype
        if needs_mask:
            col = jax.lax.broadcasted_iota(jnp.int32, chunk.shape, 1)
            valid = col < S
            cmax = jnp.where(valid, chunk, -jnp.inf)
            csum = jnp.where(valid, chunk, 0.0)
        else:
            cmax = chunk
            csum = chunk
        omax_ref[...] = jnp.max(cmax, axis=-1, keepdims=True).astype(out_dtype)
        omean_ref[...] = (
            jnp.sum(csum, axis=-1, keepdims=True, dtype=jnp.float32) * inv_s
        ).astype(out_dtype)

    return kernel


def _multi_k_kernel(S, tile_s, out_dtype):
    """Spatial reduction tiled over the last grid axis (P3 accumulator)."""
    needs_mask = (S % tile_s) != 0
    inv_s = 1.0 / float(S)

    def kernel(x_ref, omax_ref, omean_ref, sum_acc):
        k = pl.program_id(1)
        last = pl.num_programs(1) - 1

        @pl.when(k == 0)
        def _init():
            # max accumulates directly in the output ref (exact in out_dtype)
            omax_ref[...] = jnp.full_like(omax_ref, -jnp.inf)
            sum_acc[...] = jnp.zeros_like(sum_acc)

        chunk = x_ref[...]                  # (tile_r, tile_s), input dtype

        def update(cmax, csum):
            omax_ref[...] = jnp.maximum(
                omax_ref[...],
                jnp.max(cmax, axis=-1, keepdims=True).astype(out_dtype))
            sum_acc[...] = sum_acc[...] + jnp.sum(
                csum, axis=-1, keepdims=True, dtype=jnp.float32)

        if needs_mask:
            # interior tiles: no masking cost, stay HBM-bound
            @pl.when(k < last)
            def _interior():
                update(chunk, chunk)

            # only the ragged tail tile pays iota + compare + selects
            @pl.when(k == last)
            def _tail():
                col = jax.lax.broadcasted_iota(jnp.int32, chunk.shape, 1)
                valid = (k * tile_s + col) < S
                update(jnp.where(valid, chunk, -jnp.inf),
                       jnp.where(valid, chunk, 0.0))
        else:
            update(chunk, chunk)

        @pl.when(k == last)
        def _finalize():
            omean_ref[...] = (sum_acc[...] * inv_s).astype(out_dtype)

    return kernel


def adaptive_concat_pool2d(x, target_block_bytes=_TARGET_BLOCK_BYTES):
    """x: (N, C, H, W) float -> (N, 2*C, 1, 1), matching AdaptiveConcatPool2d((1,1))."""
    if not jnp.issubdtype(x.dtype, jnp.floating):
        raise TypeError("adaptive_concat_pool2d supports floating dtypes only "
                        "(-inf masking/init is not valid for integer inputs)")

    N, C, H, W = x.shape
    S = H * W
    NC = N * C

    itemsize = jnp.dtype(x.dtype).itemsize
    pack = max(8, 32 // itemsize)           # sublane packing: 8 f32, 16 bf16, 32 int8/fp8
    S_pad = _round_up(S, 128)               # lane axis multiple of 128
    NC_pad = _round_up(NC, pack)

    # --- byte-budgeted block sizing: fill ~target_block_bytes per input block ---
    max_tile_s = max(128, (target_block_bytes // (pack * itemsize)) // 128 * 128)
    tile_s = min(S_pad, max_tile_s)
    tile_r = target_block_bytes // (tile_s * itemsize)
    tile_r = max(pack, (tile_r // pack) * pack)
    tile_r = min(tile_r, NC_pad)
    # keep >= 2 row tiles when rows allow: the 'parallel' row axis is what shards
    # work across v7x's two TensorCores (costs at most one extra step elsewhere)
    tile_r = min(tile_r, _round_up(pl.cdiv(NC, 2), pack))

    grid_r = pl.cdiv(NC, tile_r)
    grid_k = pl.cdiv(S, tile_s)

    x2 = x.reshape(NC, S)                   # glue: layout prep only
    cost = pl.CostEstimate(
        flops=2 * NC * S,
        transcendentals=0,
        bytes_accessed=NC * S * itemsize + 2 * NC * itemsize,
    )
    out_shape = (
        jax.ShapeDtypeStruct((NC, 1), x.dtype),
        jax.ShapeDtypeStruct((NC, 1), x.dtype),
    )

    if grid_k == 1:
        # common case: whole spatial extent in one tile -> specialised kernel
        kernel = _single_k_kernel(S, tile_s, x.dtype)
        grid_spec = pltpu.PrefetchScalarGridSpec(
            num_scalar_prefetch=0,
            grid=(grid_r,),
            in_specs=[pl.BlockSpec((tile_r, tile_s), lambda r: (r, 0))],
            out_specs=[
                pl.BlockSpec((tile_r, 1), lambda r: (r, 0)),
                pl.BlockSpec((tile_r, 1), lambda r: (r, 0)),
            ],
            scratch_shapes=[],
        )
        dims = ("parallel",)
    else:
        kernel = _multi_k_kernel(S, tile_s, x.dtype)
        grid_spec = pltpu.PrefetchScalarGridSpec(
            num_scalar_prefetch=0,
            grid=(grid_r, grid_k),
            in_specs=[pl.BlockSpec((tile_r, tile_s), lambda r, k: (r, k))],
            out_specs=[
                pl.BlockSpec((tile_r, 1), lambda r, k: (r, 0)),
                pl.BlockSpec((tile_r, 1), lambda r, k: (r, 0)),
            ],
            scratch_shapes=[pltpu.VMEM((tile_r, 1), jnp.float32)],  # running f32 sum
        )
        dims = ("parallel", "arbitrary")

    mx, mean = pl.pallas_call(
        kernel,
        out_shape=out_shape,
        grid_spec=grid_spec,
        compiler_params=pltpu.CompilerParams(
            dimension_semantics=dims,
            vmem_limit_bytes=_VMEM_LIMIT_BYTES,
        ),
        cost_estimate=cost,
    )(x2)

    mx = mx[:, 0].reshape(N, C, 1, 1)
    mean = mean[:, 0].reshape(N, C, 1, 1)
    return jnp.concatenate([mx, mean], axis=1)   # wrapper-side concat (layout glue)


def _reference(x):
    mx = jnp.max(x, axis=(2, 3), keepdims=True)
    av = jnp.mean(x, axis=(2, 3), keepdims=True)
    return jnp.concatenate([mx, av], axis=1)


if __name__ == "__main__":
    # main check: small NCHW, f32, aligned shapes (single-k fast path)
    x = jax.random.normal(jax.random.PRNGKey(0), (2, 4, 16, 16), dtype=jnp.float32)
    out = jax.block_until_ready(adaptive_concat_pool2d(x))
    ref = _reference(x)
    assert out.shape == (2, 8, 1, 1), out.shape
    assert jnp.allclose(out, ref, atol=1e-5, rtol=1e-5), "f32 mismatch vs reference"

    # ragged check: spatial-tail masking + partial row block (single-k path)
    x2 = jax.random.normal(jax.random.PRNGKey(1), (2, 3, 7, 9), dtype=jnp.float32)
    out2 = jax.block_until_ready(adaptive_concat_pool2d(x2))
    ref2 = _reference(x2)
    assert out2.shape == (2, 6, 1, 1), out2.shape
    assert jnp.allclose(out2, ref2, atol=1e-5, rtol=1e-5), "ragged mismatch vs reference"

    # bf16 check: native-dtype max, reduce-fused f32 sum, 16-row sublane packing
    xb = jax.random.normal(jax.random.PRNGKey(2), (2, 4, 16, 16), dtype=jnp.bfloat16)
    outb = jax.block_until_ready(adaptive_concat_pool2d(xb))
    refb = _reference(xb.astype(jnp.float32))
    assert outb.shape == (2, 8, 1, 1), outb.shape
    assert jnp.allclose(outb.astype(jnp.float32), refb, atol=3e-2, rtol=3e-2), "bf16 mismatch"

    # multi-k accumulator path (forced via a tiny block budget): ragged tail masked
    # only on the last spatial tile
    x3 = jax.random.normal(jax.random.PRNGKey(3), (1, 2, 18, 18), dtype=jnp.float32)
    out3 = jax.block_until_ready(adaptive_concat_pool2d(x3, target_block_bytes=4096))
    ref3 = _reference(x3)
    assert out3.shape == (1, 4, 1, 1), out3.shape
    assert jnp.allclose(out3, ref3, atol=1e-5, rtol=1e-5), "multi-k mismatch vs reference"

    print("KERNEL_OK")
</pallas_src>

<mosaic_0001>
module attributes {stable_mosaic.version = 11 : i64} {
  func.func @kernel(%arg0: i32, %arg1: memref<8x256xf32, #tpu.memory_space<vmem>>, %arg2: memref<8x1xf32, #tpu.memory_space<vmem>>, %arg3: memref<8x1xf32, #tpu.memory_space<vmem>>) attributes {dimension_semantics = [#tpu.dimension_semantics<parallel>], iteration_bounds = array<i64: 1>, scalar_prefetch = 0 : i64, scratch_operands = 0 : i64, tpu.core_type = #tpu.core_type<tc>, window_params = [{transform_indices = @transform_0, window_bounds = array<i64: 8, 256>}, {transform_indices = @transform_1, window_bounds = array<i64: 8, 1>}, {transform_indices = @transform_2, window_bounds = array<i64: 8, 1>}]} {
    %c0 = arith.constant 0 : index
    %c0_0 = arith.constant 0 : index
    %0 = vector.load %arg1[%c0, %c0_0] : memref<8x256xf32, #tpu.memory_space<vmem>>, vector<8x256xf32>
    %cst = arith.constant dense<0xFF800000> : vector<8xf32>
    %1 = vector.multi_reduction <maximumf>, %0, %cst [1] : vector<8x256xf32> to vector<8xf32>
    %2 = vector.shape_cast %1 : vector<8xf32> to vector<8x1xf32>
    %c0_1 = arith.constant 0 : index
    %c0_2 = arith.constant 0 : index
    %3 = vector.load %arg2[%c0_1, %c0_2] : memref<8x1xf32, #tpu.memory_space<vmem>>, vector<8x1xf32>
    tpu.vector_store %arg2[%c0_1, %c0_2], %2 {strides = array<i32>} : memref<8x1xf32, #tpu.memory_space<vmem>>, vector<8x1xf32>,
    %cst_3 = arith.constant dense<0.000000e+00> : vector<8xf32>
    %4 = vector.multi_reduction <add>, %0, %cst_3 [1] : vector<8x256xf32> to vector<8xf32>
    %5 = vector.shape_cast %4 : vector<8xf32> to vector<8x1xf32>
    %cst_4 = arith.constant 3.906250e-03 : f32
    %6 = vector.broadcast %cst_4 : f32 to vector<8x1xf32>
    %7 = arith.mulf %5, %6 : vector<8x1xf32>
    %c0_5 = arith.constant 0 : index
    %c0_6 = arith.constant 0 : index
    %8 = vector.load %arg3[%c0_5, %c0_6] : memref<8x1xf32, #tpu.memory_space<vmem>>, vector<8x1xf32>
    tpu.vector_store %arg3[%c0_5, %c0_6], %7 {strides = array<i32>} : memref<8x1xf32, #tpu.memory_space<vmem>>, vector<8x1xf32>,
    return
  }
  func.func @transform_0(%arg0: i32) -> (i32, i32) {
    %c0_i32 = arith.constant 0 : i32
    %c0_i32_0 = arith.constant 0 : i32
    return %arg0, %c0_i32 : i32, i32
  }
  func.func @transform_1(%arg0: i32) -> (i32, i32) {
    %c0_i32 = arith.constant 0 : i32
    %c0_i32_0 = arith.constant 0 : i32
    return %arg0, %c0_i32 : i32, i32
  }
  func.func @transform_2(%arg0: i32) -> (i32, i32) {
    %c0_i32 = arith.constant 0 : i32
    %c0_i32_0 = arith.constant 0 : i32
    return %arg0, %c0_i32 : i32, i32
  }
}

</mosaic_0001>

<llo_original>
// kernel: tpu_custom_call.1
$region0: #{tpu_custom_call.1}
  #allocation0 [shape = 'u32[]', space=smem, size = 0x4, offset = 0x4, fixed_abs, tag = 'smem constant byte address 0x4 - core index']
  #allocation1 [shape = 'u32[72,128]{1,0:T(1,128)}', space=vmem, size = 0x9000, scoped, tag = 'internal scratch']
  %s0 = inlined_call_operand.hbm [shape: f32[8,256], index: 0, kind: input, shape index: {}]
  %s1 = inlined_call_operand.vmem [shape: f32[8,1], index: 1, kind: output, shape index: {0}]
  %s2 = inlined_call_operand.vmem [shape: f32[8,1], index: 2, kind: output, shape index: {1}]
  %3 = xla_tuple %s1, %s2
  %s4 = sld [smem:[#allocation0]]
  $region26: #{tpu_custom_call.1} parent=0
    _
  %s6 = ssub.s32 1, %s4
  %s7 = scalar_select 0, %s6, %s4
  $region1: #{tpu_custom_call.1} parent=0
    #allocation2 [shape = 'u8[8192]{0}', space=vmem, size = 0x2000, scoped, tag = 'input window, operand 0, single buffered']
    #allocation3 [shape = 's32[1]{0}', space=sflag, size = 0x4, scoped, tag = 'scoped memory for tpu_custom_call.1']
    %8 = vsyncpa [#allocation3], 0
    // Predicated region
    $region2: #{tpu_custom_call.1} parent=1 // pred_check
      _
    $region3: #{tpu_custom_call.1} parent=1 // pred_check_branch
      %10 = sbr.rel (0) target = $region5
    $region4: #{tpu_custom_call.1} parent=1 // pred_region
      %12 = vsyncadd [#allocation3], 0
      %s14 = sshll.u32 %s0, 4
      %s15 = int_to_ptr.hbm [resolvable:$true] %s14
      %s16 = sshll.u32 [#allocation2], 4
      %s17 = int_to_ptr.vmem [resolvable:$true] %s16
      %19 = dma.hbm_to_vmem [thread:$0]  %s15, 256, %s17, [#allocation3]
    $region5: #{tpu_custom_call.1} parent=1 // pred_fallthru
      _
    // Predicated region
    $region6: #{tpu_custom_call.1} parent=1 // pred_check
      _
    $region7: #{tpu_custom_call.1} parent=1 // pred_check_branch
      %21 = sbr.rel (0) target = $region9
    $region8: #{tpu_custom_call.1} parent=1 // pred_region
      %23 = dma.done [#allocation3], 256
    $region9: #{tpu_custom_call.1} parent=1 // pred_fallthru
      _
    %v24 = vld [vmem:[#allocation2] sm:$0xff]
    %v25 = vld [vmem:[#allocation2 + $0x8] sm:$0xff]
    %v26 = vmax.f32 %v24, %v25
    %27 = vmax.xlane.f32.xlu0 %v26
    %v28 = vpop.xlane.xlu0 %27
    %vm29 = vcmask 7168
    %30 = vst.msk [vmem:[%s1] sm:$0xff] %vm29, %v28
    %v31 = vadd.f32 %v24, %v25
    %32 = vadd.xlane.f32.xlu0 %v31
    %v33 = vpop.xlane.xlu0 %32
    %v34 = vmul.f32 %v33, 0.00390625
    %35 = vst.msk [vmem:[%s2] sm:$0xff] %vm29, %v34
    // Predicated region
    $region10: #{tpu_custom_call.1} parent=1 // pred_check
      _
    $region11: #{tpu_custom_call.1} parent=1 // pred_check_branch
      %37 = sbr.rel (0) target = $region13
    $region12: #{tpu_custom_call.1} parent=1 // pred_region
      _
    $region13: #{tpu_custom_call.1} parent=1 // pred_fallthru
      _
    // Predicated region
    $region14: #{tpu_custom_call.1} parent=1 // pred_check
      _
    $region15: #{tpu_custom_call.1} parent=1 // pred_check_branch
      %39 = sbr.rel (0) target = $region17
    $region16: #{tpu_custom_call.1} parent=1 // pred_region
      _
    $region17: #{tpu_custom_call.1} parent=1 // pred_fallthru
      _
    // Predicated region
    $region18: #{tpu_custom_call.1} parent=1 // pred_check
      _
    $region19: #{tpu_custom_call.1} parent=1 // pred_check_branch
      %41 = sbr.rel (0) target = $region21
    $region20: #{tpu_custom_call.1} parent=1 // pred_region
      _
    $region21: #{tpu_custom_call.1} parent=1 // pred_fallthru
      _
    // Predicated region
    $region22: #{tpu_custom_call.1} parent=1 // pred_check
      _
    $region23: #{tpu_custom_call.1} parent=1 // pred_check_branch
      %43 = sbr.rel (0) target = $region25
    $region24: #{tpu_custom_call.1} parent=1 // pred_region
      _
    $region25: #{tpu_custom_call.1} parent=1 // pred_fallthru
      _
    %44 = vsyncpa [#allocation3], 1

</llo_original>
